<compile_context>
chip_gen: v7x
topology: tpu7x:2x2x1
jax: 0.10.0
libtpu: 0.0.40
codegen_flags: <defaults>
</compile_context>

<pallas_src>
import functools

import jax
import jax.numpy as jnp
from jax.experimental import pallas as pl
from jax.experimental.pallas import tpu as pltpu


# ----------------------------------------------------------------------------
# Kernels
# ----------------------------------------------------------------------------

def _batchnorm_kernel(x_ref, gamma_ref, beta_ref, out_ref, *, eps):
    """Single-pass path: the whole batch for one lane tile is resident in VMEM."""
    x = x_ref[...].astype(jnp.float32)                      # (N, TILE_D)
    n = x.shape[0]
    inv_n = jnp.float32(1.0 / n)

    # Fused, shift-stabilized statistics: one sweep produces sum and sum-sq of
    # (x - x[0]); var = E[d^2] - E[d]^2 is cancellation-safe because the shift
    # removes the (possibly large) common mean.
    shift0 = x[0:1, :]                                      # (1, TILE_D)
    d0 = x - shift0
    m1 = jnp.sum(d0, axis=0, keepdims=True) * inv_n
    m2 = jnp.sum(d0 * d0, axis=0, keepdims=True) * inv_n
    mean = shift0 + m1
    var = jnp.maximum(m2 - m1 * m1, 0.0)                    # biased variance

    inv_std = jax.lax.rsqrt(var + jnp.float32(eps))
    scale = gamma_ref[...].astype(jnp.float32) * inv_std    # (1, TILE_D)
    shift = beta_ref[...].astype(jnp.float32) - mean * scale

    # Single fused scale/shift FMA over the big tile.
    out_ref[...] = (x * scale + shift).astype(out_ref.dtype)


def _stats_kernel(x_ref, gamma_ref, beta_ref, stats_ref,
                  s1_ref, s2_ref, shift_ref, *, eps, n_rows, tn):
    """Two-phase path, phase 1: accumulate per-column sum / sum-sq over the
    batch-tile grid axis (last, 'arbitrary'); finalize per-column scale/shift."""
    i = pl.program_id(1)

    @pl.when(i == 0)
    def _init():
        shift_ref[...] = x_ref[0:1, :].astype(jnp.float32)
        s1_ref[...] = jnp.zeros_like(s1_ref)
        s2_ref[...] = jnp.zeros_like(s2_ref)

    x = x_ref[...].astype(jnp.float32)                      # (TN, TILE_D)
    rows = jax.lax.broadcasted_iota(jnp.int32, x.shape, 0) + i * tn
    d0 = jnp.where(rows < n_rows, x - shift_ref[...], 0.0)  # mask ragged batch edge
    s1_ref[...] += jnp.sum(d0, axis=0, keepdims=True)
    s2_ref[...] += jnp.sum(d0 * d0, axis=0, keepdims=True)

    @pl.when(i == pl.num_programs(1) - 1)
    def _finalize():
        inv_n = jnp.float32(1.0 / n_rows)
        m1 = s1_ref[...] * inv_n
        m2 = s2_ref[...] * inv_n
        mean = shift_ref[...] + m1
        var = jnp.maximum(m2 - m1 * m1, 0.0)                # biased variance
        inv_std = jax.lax.rsqrt(var + jnp.float32(eps))
        scale = gamma_ref[...].astype(jnp.float32) * inv_std
        stats_ref[0:1, :] = scale
        stats_ref[1:2, :] = beta_ref[...].astype(jnp.float32) - mean * scale


def _apply_kernel(x_ref, stats_ref, out_ref):
    """Two-phase path, phase 2: out = x * scale + shift (streamed)."""
    x = x_ref[...].astype(jnp.float32)
    out_ref[...] = (x * stats_ref[0:1, :] + stats_ref[1:2, :]).astype(out_ref.dtype)


# ----------------------------------------------------------------------------
# Sizing helpers
# ----------------------------------------------------------------------------

def _round_up(v, m):
    return ((v + m - 1) // m) * m


def _vmem_budget():
    """(tile_buffer_budget, vmem_limit_bytes), derived from this chip's VMEM.

    128 MiB parts (v5e/v6e) -> limit 96 MiB, tile budget 48 MiB.
    64 MiB parts (v7x)      -> limit 48 MiB, tile budget 24 MiB.
    """
    cap = 64 << 20  # conservative fallback, safe on all generations
    try:
        info = pltpu.get_tpu_info()
        cap = int(getattr(info, "vmem_capacity_bytes", cap) or cap)
    except Exception:
        pass
    vmem_limit = min((cap * 3) // 4, 100 << 20)
    tile_budget = vmem_limit // 2  # headroom for compiler scratch + small buffers
    return tile_budget, vmem_limit


def _choose_tile_d(n, d, itemsize, budget):
    """Lane tile (multiple of 128) for the single-pass path, or None if even a
    full-batch 128-lane tile would not fit the double-buffered VMEM budget."""
    d_blocks = pl.cdiv(d, 128)
    # 2x input + 2x output tile buffers (double-buffered by BlockSpec).
    vmem_blocks = budget // (4 * n * 128 * itemsize)
    if vmem_blocks < 1:
        return None  # fall back to the two-phase large-N path
    target_blocks = max(1, (4 << 20) // (n * 128 * itemsize))  # ~4 MiB / buffer
    steps_blocks = max(1, d_blocks // 4)                       # keep >=4 grid steps
    blocks = max(1, min(vmem_blocks, target_blocks, steps_blocks, d_blocks))
    return 128 * blocks


def _choose_two_phase_tiles(n, d, itemsize, budget):
    """(batch tile TN multiple of 8, lane tile TILE_D) for the two-phase path."""
    d_blocks = pl.cdiv(d, 128)
    tile_d = 128 * min(d_blocks, 4)                 # up to 512 lanes
    rows = budget // (4 * tile_d * itemsize)        # 2x in + 2x out buffers
    tn = max(8, (rows // 8) * 8)
    tn = min(tn, _round_up(n, 8), 4096)
    return tn, tile_d


# ----------------------------------------------------------------------------
# Public wrapper
# ----------------------------------------------------------------------------

def custom_batchnorm(x, gamma, beta, eps=1e-5, force_two_phase=False):
    """Batch norm forward over axis 0. x: (N, D); gamma, beta: (D,)."""
    assert x.ndim == 2, "input must be (n_batch, n_neurons)"
    n, d = x.shape
    assert gamma.shape == (d,) and beta.shape == (d,)

    itemsize = jnp.dtype(x.dtype).itemsize
    tile_budget, vmem_limit = _vmem_budget()

    gamma2 = gamma.reshape(1, d)
    beta2 = beta.reshape(1, d)

    tile_d = None if force_two_phase else _choose_tile_d(n, d, itemsize, tile_budget)

    if tile_d is not None:
        # --- Single-pass path: whole batch per lane tile. Ragged D edge tile is
        # handled by Pallas masked loads/stores (no wrapper pad/slice of x).
        num_d = pl.cdiv(d, tile_d)
        kernel = functools.partial(_batchnorm_kernel, eps=float(eps))
        return pl.pallas_call(
            kernel,
            out_shape=jax.ShapeDtypeStruct((n, d), x.dtype),
            grid=(num_d,),
            in_specs=[
                pl.BlockSpec((n, tile_d), lambda j: (0, j)),
                pl.BlockSpec((1, tile_d), lambda j: (0, j)),
                pl.BlockSpec((1, tile_d), lambda j: (0, j)),
            ],
            out_specs=pl.BlockSpec((n, tile_d), lambda j: (0, j)),
            compiler_params=pltpu.CompilerParams(
                dimension_semantics=("parallel",),
                vmem_limit_bytes=int(vmem_limit)),
        )(x, gamma2, beta2)

    # --- Two-phase large-N path: bounded VMEM for any batch size.
    if force_two_phase:
        # Small tiles so tests exercise batch tiling + ragged-edge masking.
        tn, tile_d2 = min(16, _round_up(n, 8)), 128
    else:
        tn, tile_d2 = _choose_two_phase_tiles(n, d, itemsize, tile_budget)

    num_d = pl.cdiv(d, tile_d2)
    num_n = pl.cdiv(n, tn)

    stats_kernel = functools.partial(
        _stats_kernel, eps=float(eps), n_rows=n, tn=tn)
    stats = pl.pallas_call(
        stats_kernel,
        out_shape=jax.ShapeDtypeStruct((2, d), jnp.float32),  # rows: scale, shift
        grid=(num_d, num_n),
        in_specs=[
            pl.BlockSpec((tn, tile_d2), lambda j, i: (i, j)),
            pl.BlockSpec((1, tile_d2), lambda j, i: (0, j)),
            pl.BlockSpec((1, tile_d2), lambda j, i: (0, j)),
        ],
        out_specs=pl.BlockSpec((2, tile_d2), lambda j, i: (0, j)),
        scratch_shapes=[
            pltpu.VMEM((1, tile_d2), jnp.float32),  # sum
            pltpu.VMEM((1, tile_d2), jnp.float32),  # sum of squares
            pltpu.VMEM((1, tile_d2), jnp.float32),  # per-column shift (row 0)
        ],
        compiler_params=pltpu.CompilerParams(
            dimension_semantics=("parallel", "arbitrary"),
            vmem_limit_bytes=int(vmem_limit)),
    )(x, gamma2, beta2)

    out = pl.pallas_call(
        _apply_kernel,
        out_shape=jax.ShapeDtypeStruct((n, d), x.dtype),
        grid=(num_d, num_n),
        in_specs=[
            pl.BlockSpec((tn, tile_d2), lambda j, i: (i, j)),
            pl.BlockSpec((2, tile_d2), lambda j, i: (0, j)),
        ],
        out_specs=pl.BlockSpec((tn, tile_d2), lambda j, i: (i, j)),
        compiler_params=pltpu.CompilerParams(
            dimension_semantics=("parallel", "parallel"),
            vmem_limit_bytes=int(vmem_limit)),
    )(x, stats)
    return out


def _reference(x, gamma, beta, eps):
    mean = jnp.mean(x, axis=0)
    var = jnp.var(x, axis=0)  # biased, matches unbiased=False
    return gamma * (x - mean) / jnp.sqrt(var + eps) + beta


if __name__ == "__main__":
    key = jax.random.PRNGKey(0)

    # Case 1: the module's nominal small shape (n_batch, n_neurons).
    n_batch, n_neurons = 8, 32
    k1, k2 = jax.random.split(key)
    x = jax.random.normal(k1, (n_batch, n_neurons), dtype=jnp.float32)
    gamma = jnp.ones((n_neurons,), dtype=jnp.float32)   # nn.Parameter(torch.ones)
    beta = jnp.zeros((n_neurons,), dtype=jnp.float32)   # nn.Parameter(torch.zeros)

    out = custom_batchnorm(x, gamma, beta, eps=1e-5)
    jax.block_until_ready(out)
    ref = _reference(x, gamma, beta, 1e-5)
    assert jnp.allclose(out, ref, atol=1e-5, rtol=1e-5), "mismatch vs reference (case 1)"

    # Case 2: non-multiple-of-128 D with non-trivial gamma/beta and custom eps
    # (exercises the ragged/masked edge tile + eps plumbing, no wrapper padding).
    n_batch2, n_neurons2 = 16, 200
    k3, k4, k5 = jax.random.split(k2, 3)
    x2 = jax.random.normal(k3, (n_batch2, n_neurons2), dtype=jnp.float32) * 3.0 + 1.5
    gamma2 = jax.random.normal(k4, (n_neurons2,), dtype=jnp.float32)
    beta2 = jax.random.normal(k5, (n_neurons2,), dtype=jnp.float32)

    out2 = custom_batchnorm(x2, gamma2, beta2, eps=1e-3)
    jax.block_until_ready(out2)
    ref2 = _reference(x2, gamma2, beta2, 1e-3)
    assert jnp.allclose(out2, ref2, atol=1e-4, rtol=1e-4), "mismatch vs reference (case 2)"

    # Case 3: force the two-phase (large-N) path at a small, ragged shape so the
    # accumulator grid, pl.when init/finalize and batch-edge masking are tested.
    n_batch3, n_neurons3 = 20, 200
    k6, _ = jax.random.split(k5)
    x3 = jax.random.normal(k6, (n_batch3, n_neurons3), dtype=jnp.float32) * 2.0 - 0.7

    out3 = custom_batchnorm(x3, gamma2, beta2, eps=1e-5, force_two_phase=True)
    jax.block_until_ready(out3)
    ref3 = _reference(x3, gamma2, beta2, 1e-5)
    assert jnp.allclose(out3, ref3, atol=1e-4, rtol=1e-4), "mismatch vs reference (case 3)"

    print("KERNEL_OK")
</pallas_src>

<mosaic_0001>
module attributes {stable_mosaic.version = 11 : i64} {
  func.func @_batchnorm_kernel(%arg0: i32, %arg1: memref<8x128xf32, #tpu.memory_space<vmem>>, %arg2: memref<1x128xf32, #tpu.memory_space<vmem>>, %arg3: memref<1x128xf32, #tpu.memory_space<vmem>>, %arg4: memref<8x128xf32, #tpu.memory_space<vmem>>) attributes {dimension_semantics = [#tpu.dimension_semantics<parallel>], iteration_bounds = array<i64: 1>, scalar_prefetch = 0 : i64, scratch_operands = 0 : i64, tpu.core_type = #tpu.core_type<tc>, window_params = [{transform_indices = @transform_0, window_bounds = array<i64: 8, 128>}, {transform_indices = @transform_1, window_bounds = array<i64: 1, 128>}, {transform_indices = @transform_2, window_bounds = array<i64: 1, 128>}, {transform_indices = @transform_3, window_bounds = array<i64: 8, 128>}]} {
    %c0 = arith.constant 0 : index
    %c0_0 = arith.constant 0 : index
    %0 = vector.load %arg1[%c0, %c0_0] : memref<8x128xf32, #tpu.memory_space<vmem>>, vector<8x128xf32>
    %1 = vector.extract_strided_slice %0 {offsets = [0, 0], sizes = [1, 128], strides = [1, 1]} : vector<8x128xf32> to vector<1x128xf32>
    %2 = vector.broadcast %1 : vector<1x128xf32> to vector<8x128xf32>
    %3 = arith.subf %0, %2 : vector<8x128xf32>
    %cst = arith.constant dense<0.000000e+00> : vector<128xf32>
    %4 = vector.multi_reduction <add>, %3, %cst [0] : vector<8x128xf32> to vector<128xf32>
    %5 = vector.shape_cast %4 : vector<128xf32> to vector<1x128xf32>
    %cst_1 = arith.constant 1.250000e-01 : f32
    %6 = vector.broadcast %cst_1 : f32 to vector<1x128xf32>
    %7 = arith.mulf %5, %6 : vector<1x128xf32>
    %8 = arith.mulf %3, %3 : vector<8x128xf32>
    %cst_2 = arith.constant dense<0.000000e+00> : vector<128xf32>
    %9 = vector.multi_reduction <add>, %8, %cst_2 [0] : vector<8x128xf32> to vector<128xf32>
    %10 = vector.shape_cast %9 : vector<128xf32> to vector<1x128xf32>
    %cst_3 = arith.constant 1.250000e-01 : f32
    %11 = vector.broadcast %cst_3 : f32 to vector<1x128xf32>
    %12 = arith.mulf %10, %11 : vector<1x128xf32>
    %13 = arith.addf %1, %7 : vector<1x128xf32>
    %14 = arith.mulf %7, %7 : vector<1x128xf32>
    %15 = arith.subf %12, %14 : vector<1x128xf32>
    %cst_4 = arith.constant 0.000000e+00 : f32
    %16 = vector.broadcast %cst_4 : f32 to vector<1x128xf32>
    %17 = arith.maximumf %15, %16 : vector<1x128xf32>
    %cst_5 = arith.constant 9.99999974E-6 : f32
    %18 = vector.broadcast %cst_5 : f32 to vector<1x128xf32>
    %19 = arith.addf %17, %18 : vector<1x128xf32>
    %20 = math.rsqrt %19 : vector<1x128xf32>
    %c0_6 = arith.constant 0 : index
    %c0_7 = arith.constant 0 : index
    %21 = vector.load %arg2[%c0_6, %c0_7] : memref<1x128xf32, #tpu.memory_space<vmem>>, vector<1x128xf32>
    %22 = arith.mulf %21, %20 : vector<1x128xf32>
    %c0_8 = arith.constant 0 : index
    %c0_9 = arith.constant 0 : index
    %23 = vector.load %arg3[%c0_8, %c0_9] : memref<1x128xf32, #tpu.memory_space<vmem>>, vector<1x128xf32>
    %24 = arith.mulf %13, %22 : vector<1x128xf32>
    %25 = arith.subf %23, %24 : vector<1x128xf32>
    %26 = vector.broadcast %22 : vector<1x128xf32> to vector<8x128xf32>
    %27 = arith.mulf %0, %26 : vector<8x128xf32>
    %28 = vector.broadcast %25 : vector<1x128xf32> to vector<8x128xf32>
    %29 = arith.addf %27, %28 : vector<8x128xf32>
    %c0_10 = arith.constant 0 : index
    %c0_11 = arith.constant 0 : index
    %30 = vector.load %arg4[%c0_10, %c0_11] : memref<8x128xf32, #tpu.memory_space<vmem>>, vector<8x128xf32>
    tpu.vector_store %arg4[%c0_10, %c0_11], %29 {strides = array<i32>} : memref<8x128xf32, #tpu.memory_space<vmem>>, vector<8x128xf32>,
    return
  }
  func.func @transform_0(%arg0: i32) -> (i32, i32) {
    %c0_i32 = arith.constant 0 : i32
    %c0_i32_0 = arith.constant 0 : i32
    return %c0_i32, %arg0 : i32, i32
  }
  func.func @transform_1(%arg0: i32) -> (i32, i32) {
    %c0_i32 = arith.constant 0 : i32
    %c0_i32_0 = arith.constant 0 : i32
    return %c0_i32, %arg0 : i32, i32
  }
  func.func @transform_2(%arg0: i32) -> (i32, i32) {
    %c0_i32 = arith.constant 0 : i32
    %c0_i32_0 = arith.constant 0 : i32
    return %c0_i32, %arg0 : i32, i32
  }
  func.func @transform_3(%arg0: i32) -> (i32, i32) {
    %c0_i32 = arith.constant 0 : i32
    %c0_i32_0 = arith.constant 0 : i32
    return %c0_i32, %arg0 : i32, i32
  }
}

</mosaic_0001>

<llo_original>
// kernel: tpu_custom_call.1
$region0: #{tpu_custom_call.1}
  #allocation0 [shape = 'u32[]', space=smem, size = 0x4, offset = 0x4, fixed_abs, tag = 'smem constant byte address 0x4 - core index']
  #allocation1 [shape = 'u32[144,128]{1,0:T(1,128)}', space=vmem, size = 0x12000, scoped, tag = 'internal scratch']
  %s0 = inlined_call_operand.hbm [shape: f32[8,32], index: 0, kind: input, shape index: {}]
  %s1 = inlined_call_operand.vmem [shape: f32[1,32], index: 1, kind: input, shape index: {}]
  %s2 = inlined_call_operand.vmem [shape: f32[1,32], index: 2, kind: input, shape index: {}]
  %s3 = inlined_call_operand.hbm [shape: f32[8,32], index: 3, kind: output, shape index: {}]
  %s4 = sld [smem:[#allocation0]]
  $region26: #{tpu_custom_call.1} parent=0
    _
  %s6 = ssub.s32 1, %s4
  %s7 = scalar_select 0, %s6, %s4
  $region1: #{tpu_custom_call.1} parent=0
    #allocation2 [shape = 'u8[4096]{0}', space=vmem, size = 0x1000, scoped, tag = 'input window, operand 0, single buffered']
    #allocation3 [shape = 's32[1]{0}', space=sflag, size = 0x4, scoped, tag = 'scoped memory for tpu_custom_call.1']
    #allocation4 [shape = 's32[1]{0}', space=sflag, size = 0x4, scoped, tag = 'scoped memory for tpu_custom_call.1']
    #allocation5 [shape = 'u8[4096]{0}', space=vmem, size = 0x1000, scoped, tag = 'output window, operand 0, single buffered']
    %8 = vsyncpa [#allocation3], 0
    %9 = vsyncpa [#allocation4], 0
    // Predicated region
    $region2: #{tpu_custom_call.1} parent=1 // pred_check
      _
    $region3: #{tpu_custom_call.1} parent=1 // pred_check_branch
      %11 = sbr.rel (0) target = $region5
    $region4: #{tpu_custom_call.1} parent=1 // pred_region
      %s13 = ssub.s32 128, 128
      %14 = vsyncadd [#allocation3], %s13
      %s16 = sshll.u32 [#allocation2], 4
      %s17 = int_to_ptr.vmem [resolvable:$true] %s16
      %19 = dma.hbm_to_vmem [thread:$0]  %s0, 128, %s17, [#allocation3]
    $region5: #{tpu_custom_call.1} parent=1 // pred_fallthru
      _
    // Predicated region
    $region6: #{tpu_custom_call.1} parent=1 // pred_check
      _
    $region7: #{tpu_custom_call.1} parent=1 // pred_check_branch
      %21 = sbr.rel (0) target = $region9
    $region8: #{tpu_custom_call.1} parent=1 // pred_region
      _
    $region9: #{tpu_custom_call.1} parent=1 // pred_fallthru
      _
    // Predicated region
    $region10: #{tpu_custom_call.1} parent=1 // pred_check
      _
    $region11: #{tpu_custom_call.1} parent=1 // pred_check_branch
      %23 = sbr.rel (0) target = $region13
    $region12: #{tpu_custom_call.1} parent=1 // pred_region
      _
    $region13: #{tpu_custom_call.1} parent=1 // pred_fallthru
      _
    // Predicated region
    $region14: #{tpu_custom_call.1} parent=1 // pred_check
      _
    $region15: #{tpu_custom_call.1} parent=1 // pred_check_branch
      %25 = sbr.rel (0) target = $region17
    $region16: #{tpu_custom_call.1} parent=1 // pred_region
      %26 = dma.done [#allocation3], 128
    $region17: #{tpu_custom_call.1} parent=1 // pred_fallthru
      _
    %v27 = vld [vmem:[#allocation2] sm:$0xff]
    %v28 = vlaneseq
    %v29 = vshrl.u32 %v28, 7
    %v30 = vsub.s32 0, %v29
    %v31 = vrot.slane %v27, %v30
    %v32 = vsub.f32 %v27, %v31
    %v33 = vrot.slane %v32, 4
    %v34 = vadd.f32 %v32, %v33
    %v35 = vrot.slane %v34, 2
    %v36 = vadd.f32 %v34, %v35
    %v37 = vrot.slane %v36, 1
    %v38 = vadd.f32 %v36, %v37
    %v39 = vmul.f32 %v38, 0.125
    %v40 = vmul.f32 %v32, %v32
    %v41 = vrot.slane %v40, 4
    %v42 = vadd.f32 %v40, %v41
    %v43 = vrot.slane %v42, 2
    %v44 = vadd.f32 %v42, %v43
    %v45 = vrot.slane %v44, 1
    %v46 = vadd.f32 %v44, %v45
    %v47 = vmul.f32 %v46, 0.125
    %v48 = vadd.f32 %v27, %v39
    %v49 = vmul.f32 %v39, %v39
    %v50 = vsub.f32 %v47, %v49
    %v51 = vmax.f32 %v50, 0.0
    %v52 = vadd.f32 %v51, 1e-05
    %v53 = vrsqrt.pop %v52
    %v54 = vld [vmem:[%s1] sm:$0x1]
    %v55 = vmul.f32 %v54, %v53
    %v56 = vld [vmem:[%s2] sm:$0x1]
    %v57 = vmul.f32 %v48, %v55
    %v58 = vsub.f32 %v56, %v57
    %v60 = vlaneseq
    %v61 = vshrl.u32 %v60, 7
    %v62 = vsub.s32 0, %v61
    %v63 = vrot.slane %v55, %v62
    %v65 = vmul.f32 %v27, %v63
    %v67 = vlaneseq
    %v68 = vshrl.u32 %v67, 7
    %v69 = vsub.s32 0, %v68
    %v70 = vrot.slane %v58, %v69
    %v72 = vadd.f32 %v65, %v70
    %73 = vst [vmem:[#allocation5] sm:$0xff] %v72
    // Predicated region
    $region18: #{tpu_custom_call.1} parent=1 // pred_check
      _
    $region19: #{tpu_custom_call.1} parent=1 // pred_check_branch
      %75 = sbr.rel (0) target = $region21
    $region20: #{tpu_custom_call.1} parent=1 // pred_region
      %s77 = ssub.s32 128, 128
      %78 = vsyncadd [#allocation4], %s77
      %s80 = sshll.u32 [#allocation5], 4
      %s81 = int_to_ptr.vmem [resolvable:$true] %s80
      %83 = dma.vmem_to_hbm [thread:$0]  %s81, 128, %s3, [#allocation4]
    $region21: #{tpu_custom_call.1} parent=1 // pred_fallthru
      _
    // Predicated region
    $region22: #{tpu_custom_call.1} parent=1 // pred_check
      _
    $region23: #{tpu_custom_call.1} parent=1 // pred_check_branch
      %85 = sbr.rel (0) target = $region25
    $region24: #{tpu_custom_call.1} parent=1 // pred_region
      %86 = dma.done [#allocation4], 128
    $region25: #{tpu_custom_call.1} parent=1 // pred_fallthru
      _
    %87 = vsyncpa [#allocation3], 1
    %88 = vsyncpa [#allocation4], 1

</llo_original>
